<compile_context>
chip_gen: v7x
topology: tpu7x:2x2x1
jax: 0.10.0
libtpu: 0.0.40
codegen_flags: <defaults>
</compile_context>

<pallas_src>
import jax
import jax.numpy as jnp
from jax.experimental import pallas as pl
from jax.experimental.pallas import tpu as pltpu


def _flattened_output_kernel(xc_ref, xp_ref, xs_ref,
                             wc_ref, wp_ref, ws_ref,
                             b_ref, o_ref):
    """One batch tile: fused concat + Linear(D_in, 2) + 2-class softmax.

    xc/xp/xs : (TB, D_piece) flattened encoder pieces (native dtype)
    wc/wp/ws : (2,  D_piece) matching slabs of the PyTorch Linear weight
    b_ref    : (2,) bias scalars in SMEM
    o_ref    : (TB, 2) softmax probabilities (f32)
    """

    def partial_logits(x_ref, w_ref):
        # Compute in f32 (v5e VPU/EUP have no bf16 path; f32 matches the ref).
        x = x_ref[...].astype(jnp.float32)            # (TB, D)
        w = w_ref[...].astype(jnp.float32)            # (2,  D)
        # VPU broadcast-multiply + XLU lane reduce; MXU stays free.
        l0 = jnp.sum(x * w[0:1, :], axis=-1, keepdims=True)   # (TB, 1)
        l1 = jnp.sum(x * w[1:2, :], axis=-1, keepdims=True)   # (TB, 1)
        return l0, l1

    l0c, l1c = partial_logits(xc_ref, wc_ref)
    l0p, l1p = partial_logits(xp_ref, wp_ref)
    l0s, l1s = partial_logits(xs_ref, ws_ref)

    b0 = b_ref[0]
    b1 = b_ref[1]
    # logit0 - logit1 (bias folded in as two SMEM scalars).
    diff = (l0c + l0p + l0s) - (l1c + l1p + l1s) + (b0 - b1)   # (TB, 1) f32

    # softmax([l0, l1]) == [sigmoid(l0 - l1), 1 - sigmoid(l0 - l1)]
    # exp -> EUP; exact reciprocal keeps bit-level fidelity with the softmax
    # reference (use approx=True if a ~1e-4 relative error is acceptable).
    e = jnp.exp(-diff)
    p0 = pl.reciprocal(1.0 + e)                                # (TB, 1)
    p1 = 1.0 - p0
    o_ref[...] = jnp.concatenate([p0, p1], axis=-1).astype(o_ref.dtype)


def flattened_output(cls_tok, phenos, seq_out, weight, bias, *, block_b=256):
    """Pallas implementation of FlattenedOutput.forward.

    cls_tok: (B, 1, E), phenos: (B, P, E), seq_out: (B, S-1, E)  (any float dtype)
    weight:  (2, D_in)  PyTorch nn.Linear weight layout, D_in = E * (S + P)
    bias:    (2,)
    returns: (B, 2) float32 softmax probabilities
    """
    B = cls_tok.shape[0]
    E = cls_tok.shape[-1]
    d_cls = cls_tok.shape[1] * E
    d_ph = phenos.shape[1] * E
    d_seq = seq_out.shape[1] * E
    d_in = d_cls + d_ph + d_seq
    assert weight.shape == (2, d_in), (weight.shape, d_in)

    # Free reshapes (merge contiguous trailing dims) — no concat, no cast,
    # no extra HBM round trip.
    x_cls = cls_tok.reshape(B, d_cls)
    x_ph = phenos.reshape(B, d_ph)
    x_seq = seq_out.reshape(B, d_seq)

    # Weight slabs matching the concat order: [cls | phenos | seq_out].
    w_cls = weight[:, :d_cls]
    w_ph = weight[:, d_cls:d_cls + d_ph]
    w_seq = weight[:, d_cls + d_ph:]
    b_smem = bias.astype(jnp.float32)                  # 2 scalars -> SMEM

    # Batch tile: full array when small, else a multiple-of-8 row tile.
    tb = B if B <= block_b else block_b
    grid = (pl.cdiv(B, tb),)

    x_item = jnp.dtype(cls_tok.dtype).itemsize
    w_item = jnp.dtype(weight.dtype).itemsize
    cost = pl.CostEstimate(
        flops=2 * B * d_in * 2,
        transcendentals=B,
        bytes_accessed=B * d_in * x_item + 2 * d_in * w_item + B * 2 * 4,
    )

    return pl.pallas_call(
        _flattened_output_kernel,
        out_shape=jax.ShapeDtypeStruct((B, 2), jnp.float32),
        grid=grid,
        in_specs=[
            pl.BlockSpec((tb, d_cls), lambda i: (i, 0)),
            pl.BlockSpec((tb, d_ph), lambda i: (i, 0)),
            pl.BlockSpec((tb, d_seq), lambda i: (i, 0)),
            pl.BlockSpec((2, d_cls), lambda i: (0, 0)),
            pl.BlockSpec((2, d_ph), lambda i: (0, 0)),
            pl.BlockSpec((2, d_seq), lambda i: (0, 0)),
            pl.BlockSpec(memory_space=pltpu.MemorySpace.SMEM),   # bias scalars
        ],
        out_specs=pl.BlockSpec((tb, 2), lambda i: (i, 0)),
        compiler_params=pltpu.CompilerParams(
            dimension_semantics=("parallel",),   # megacore / 2-TC split over batch
        ),
        cost_estimate=cost,
    )(x_cls, x_ph, x_seq, w_cls, w_ph, w_seq, b_smem)


if __name__ == "__main__":
    # Small shapes consistent with the module.
    B = 2            # batch
    E = 32           # embed_dim
    S = 8            # seq_len  (cls token + S-1 sequence tokens)
    P = 4            # num_phenos
    D_IN = E * (S + P)

    key = jax.random.PRNGKey(0)
    k1, k2, k3, k4, k5 = jax.random.split(key, 5)

    cls_tok = jax.random.normal(k1, (B, 1, E), dtype=jnp.float32)
    phenos = jax.random.normal(k2, (B, P, E), dtype=jnp.float32)
    seq_out = jax.random.normal(k3, (B, S - 1, E), dtype=jnp.float32)

    # PyTorch-style Linear params: weight (2, D_IN), bias (2,).
    bound = 1.0 / (D_IN ** 0.5)
    weight = jax.random.uniform(k4, (2, D_IN), minval=-bound, maxval=bound,
                                dtype=jnp.float32)
    bias = jax.random.uniform(k5, (2,), minval=-bound, maxval=bound,
                              dtype=jnp.float32)

    out = jax.jit(flattened_output)(cls_tok, phenos, seq_out, weight, bias)
    out = jax.block_until_ready(out)

    # Reference: plain-JAX equivalent of the PyTorch module.
    flat = jnp.concatenate([cls_tok, phenos, seq_out], axis=1).reshape(B, -1)
    ref = jax.nn.softmax(flat @ weight.T + bias, axis=1)

    assert out.shape == (B, 2)
    assert jnp.allclose(jnp.sum(out, axis=1), 1.0, atol=1e-5)
    assert jnp.allclose(out, ref, atol=1e-5, rtol=1e-5)

    print("KERNEL_OK")
</pallas_src>

<mosaic_0001>
module attributes {stable_mosaic.version = 11 : i64} {
  func.func @_flattened_output_kernel(%arg0: i32, %arg1: memref<2x32xf32, #tpu.memory_space<vmem>>, %arg2: memref<2x128xf32, #tpu.memory_space<vmem>>, %arg3: memref<2x224xf32, #tpu.memory_space<vmem>>, %arg4: memref<2x32xf32, #tpu.memory_space<vmem>>, %arg5: memref<2x128xf32, #tpu.memory_space<vmem>>, %arg6: memref<2x224xf32, #tpu.memory_space<vmem>>, %arg7: memref<2xf32, #tpu.memory_space<smem>>, %arg8: memref<2x2xf32, #tpu.memory_space<vmem>>) attributes {dimension_semantics = [#tpu.dimension_semantics<parallel>], iteration_bounds = array<i64: 1>, scalar_prefetch = 0 : i64, scratch_operands = 0 : i64, tpu.core_type = #tpu.core_type<tc>, window_params = [{transform_indices = @transform_0, window_bounds = array<i64: 2, 32>}, {transform_indices = @transform_1, window_bounds = array<i64: 2, 128>}, {transform_indices = @transform_2, window_bounds = array<i64: 2, 224>}, {pipeline_mode = #tpu.pipeline_mode<synchronous>, transform_indices = @transform_3, window_bounds = array<i64: 2, 32>}, {pipeline_mode = #tpu.pipeline_mode<synchronous>, transform_indices = @transform_4, window_bounds = array<i64: 2, 128>}, {pipeline_mode = #tpu.pipeline_mode<synchronous>, transform_indices = @transform_5, window_bounds = array<i64: 2, 224>}, {transform_indices = @transform_6, window_bounds = array<i64: 2>}, {transform_indices = @transform_7, window_bounds = array<i64: 2, 2>}]} {
    %c0 = arith.constant 0 : index
    %c0_0 = arith.constant 0 : index
    %0 = vector.load %arg1[%c0, %c0_0] : memref<2x32xf32, #tpu.memory_space<vmem>>, vector<2x32xf32>
    %c0_1 = arith.constant 0 : index
    %c0_2 = arith.constant 0 : index
    %1 = vector.load %arg4[%c0_1, %c0_2] : memref<2x32xf32, #tpu.memory_space<vmem>>, vector<2x32xf32>
    %2 = vector.extract_strided_slice %1 {offsets = [0, 0], sizes = [1, 32], strides = [1, 1]} : vector<2x32xf32> to vector<1x32xf32>
    %3 = vector.broadcast %2 : vector<1x32xf32> to vector<2x32xf32>
    %4 = arith.mulf %0, %3 : vector<2x32xf32>
    %cst = arith.constant dense<0.000000e+00> : vector<2xf32>
    %5 = vector.multi_reduction <add>, %4, %cst [1] : vector<2x32xf32> to vector<2xf32>
    %6 = vector.shape_cast %5 : vector<2xf32> to vector<2x1xf32>
    %7 = vector.extract_strided_slice %1 {offsets = [1, 0], sizes = [1, 32], strides = [1, 1]} : vector<2x32xf32> to vector<1x32xf32>
    %8 = vector.broadcast %7 : vector<1x32xf32> to vector<2x32xf32>
    %9 = arith.mulf %0, %8 : vector<2x32xf32>
    %cst_3 = arith.constant dense<0.000000e+00> : vector<2xf32>
    %10 = vector.multi_reduction <add>, %9, %cst_3 [1] : vector<2x32xf32> to vector<2xf32>
    %11 = vector.shape_cast %10 : vector<2xf32> to vector<2x1xf32>
    %c0_4 = arith.constant 0 : index
    %c0_5 = arith.constant 0 : index
    %12 = vector.load %arg2[%c0_4, %c0_5] : memref<2x128xf32, #tpu.memory_space<vmem>>, vector<2x128xf32>
    %c0_6 = arith.constant 0 : index
    %c0_7 = arith.constant 0 : index
    %13 = vector.load %arg5[%c0_6, %c0_7] : memref<2x128xf32, #tpu.memory_space<vmem>>, vector<2x128xf32>
    %14 = vector.extract_strided_slice %13 {offsets = [0, 0], sizes = [1, 128], strides = [1, 1]} : vector<2x128xf32> to vector<1x128xf32>
    %15 = vector.broadcast %14 : vector<1x128xf32> to vector<2x128xf32>
    %16 = arith.mulf %12, %15 : vector<2x128xf32>
    %cst_8 = arith.constant dense<0.000000e+00> : vector<2xf32>
    %17 = vector.multi_reduction <add>, %16, %cst_8 [1] : vector<2x128xf32> to vector<2xf32>
    %18 = vector.shape_cast %17 : vector<2xf32> to vector<2x1xf32>
    %19 = vector.extract_strided_slice %13 {offsets = [1, 0], sizes = [1, 128], strides = [1, 1]} : vector<2x128xf32> to vector<1x128xf32>
    %20 = vector.broadcast %19 : vector<1x128xf32> to vector<2x128xf32>
    %21 = arith.mulf %12, %20 : vector<2x128xf32>
    %cst_9 = arith.constant dense<0.000000e+00> : vector<2xf32>
    %22 = vector.multi_reduction <add>, %21, %cst_9 [1] : vector<2x128xf32> to vector<2xf32>
    %23 = vector.shape_cast %22 : vector<2xf32> to vector<2x1xf32>
    %c0_10 = arith.constant 0 : index
    %c0_11 = arith.constant 0 : index
    %24 = vector.load %arg3[%c0_10, %c0_11] : memref<2x224xf32, #tpu.memory_space<vmem>>, vector<2x224xf32>
    %c0_12 = arith.constant 0 : index
    %c0_13 = arith.constant 0 : index
    %25 = vector.load %arg6[%c0_12, %c0_13] : memref<2x224xf32, #tpu.memory_space<vmem>>, vector<2x224xf32>
    %26 = vector.extract_strided_slice %25 {offsets = [0, 0], sizes = [1, 224], strides = [1, 1]} : vector<2x224xf32> to vector<1x224xf32>
    %27 = vector.broadcast %26 : vector<1x224xf32> to vector<2x224xf32>
    %28 = arith.mulf %24, %27 : vector<2x224xf32>
    %cst_14 = arith.constant dense<0.000000e+00> : vector<2xf32>
    %29 = vector.multi_reduction <add>, %28, %cst_14 [1] : vector<2x224xf32> to vector<2xf32>
    %30 = vector.shape_cast %29 : vector<2xf32> to vector<2x1xf32>
    %31 = vector.extract_strided_slice %25 {offsets = [1, 0], sizes = [1, 224], strides = [1, 1]} : vector<2x224xf32> to vector<1x224xf32>
    %32 = vector.broadcast %31 : vector<1x224xf32> to vector<2x224xf32>
    %33 = arith.mulf %24, %32 : vector<2x224xf32>
    %cst_15 = arith.constant dense<0.000000e+00> : vector<2xf32>
    %34 = vector.multi_reduction <add>, %33, %cst_15 [1] : vector<2x224xf32> to vector<2xf32>
    %35 = vector.shape_cast %34 : vector<2xf32> to vector<2x1xf32>
    %c0_16 = arith.constant 0 : index
    %36 = memref.load %arg7[%c0_16] : memref<2xf32, #tpu.memory_space<smem>>
    %c1 = arith.constant 1 : index
    %37 = memref.load %arg7[%c1] : memref<2xf32, #tpu.memory_space<smem>>
    %38 = arith.addf %6, %18 : vector<2x1xf32>
    %39 = arith.addf %38, %30 : vector<2x1xf32>
    %40 = arith.addf %11, %23 : vector<2x1xf32>
    %41 = arith.addf %40, %35 : vector<2x1xf32>
    %42 = arith.subf %39, %41 : vector<2x1xf32>
    %43 = arith.subf %36, %37 : f32
    %44 = vector.broadcast %43 : f32 to vector<2x1xf32>
    %45 = arith.addf %42, %44 : vector<2x1xf32>
    %cst_17 = arith.constant 0.000000e+00 : f32
    %46 = vector.broadcast %cst_17 : f32 to vector<2x1xf32>
    %47 = arith.subf %46, %45 : vector<2x1xf32>
    %48 = math.exp %47 : vector<2x1xf32>
    %cst_18 = arith.constant 1.000000e+00 : f32
    %49 = vector.broadcast %cst_18 : f32 to vector<2x1xf32>
    %50 = arith.addf %49, %48 : vector<2x1xf32>
    %51 = tpu.reciprocal %50 : vector<2x1xf32> -> vector<2x1xf32>
    %cst_19 = arith.constant 1.000000e+00 : f32
    %52 = vector.broadcast %cst_19 : f32 to vector<2x1xf32>
    %53 = arith.subf %52, %51 : vector<2x1xf32>
    %54 = tpu.concatenate %51, %53 in 1 : vector<2x1xf32>, vector<2x1xf32> -> vector<2x2xf32>
    %c0_20 = arith.constant 0 : index
    %c0_21 = arith.constant 0 : index
    %55 = vector.load %arg8[%c0_20, %c0_21] : memref<2x2xf32, #tpu.memory_space<vmem>>, vector<2x2xf32>
    tpu.vector_store %arg8[%c0_20, %c0_21], %54 {strides = array<i32>} : memref<2x2xf32, #tpu.memory_space<vmem>>, vector<2x2xf32>,
    return
  }
  func.func @transform_0(%arg0: i32) -> (i32, i32) {
    %c0_i32 = arith.constant 0 : i32
    %c0_i32_0 = arith.constant 0 : i32
    return %arg0, %c0_i32 : i32, i32
  }
  func.func @transform_1(%arg0: i32) -> (i32, i32) {
    %c0_i32 = arith.constant 0 : i32
    %c0_i32_0 = arith.constant 0 : i32
    return %arg0, %c0_i32 : i32, i32
  }
  func.func @transform_2(%arg0: i32) -> (i32, i32) {
    %c0_i32 = arith.constant 0 : i32
    %c0_i32_0 = arith.constant 0 : i32
    return %arg0, %c0_i32 : i32, i32
  }
  func.func @transform_3(%arg0: i32) -> (i32, i32) {
    %c0_i32 = arith.constant 0 : i32
    %c0_i32_0 = arith.constant 0 : i32
    %c0_i32_1 = arith.constant 0 : i32
    return %c0_i32, %c0_i32_0 : i32, i32
  }
  func.func @transform_4(%arg0: i32) -> (i32, i32) {
    %c0_i32 = arith.constant 0 : i32
    %c0_i32_0 = arith.constant 0 : i32
    %c0_i32_1 = arith.constant 0 : i32
    return %c0_i32, %c0_i32_0 : i32, i32
  }
  func.func @transform_5(%arg0: i32) -> (i32, i32) {
    %c0_i32 = arith.constant 0 : i32
    %c0_i32_0 = arith.constant 0 : i32
    %c0_i32_1 = arith.constant 0 : i32
    return %c0_i32, %c0_i32_0 : i32, i32
  }
  func.func @transform_6(%arg0: i32) -> i32 {
    %c0_i32 = arith.constant 0 : i32
    %c0_i32_0 = arith.constant 0 : i32
    return %c0_i32 : i32
  }
  func.func @transform_7(%arg0: i32) -> (i32, i32) {
    %c0_i32 = arith.constant 0 : i32
    %c0_i32_0 = arith.constant 0 : i32
    return %arg0, %c0_i32 : i32, i32
  }
}

</mosaic_0001>

<llo_original>
// kernel: flattened_output.1
$region0: #{flattened_output.1}
  #allocation0 [shape = 'u32[]', space=smem, size = 0x4, offset = 0x4, fixed_abs, tag = 'smem constant byte address 0x4 - core index']
  #allocation1 [shape = 'u32[144,128]{1,0:T(1,128)}', space=vmem, size = 0x12000, scoped, tag = 'internal scratch']
  %s0 = inlined_call_operand.vmem [shape: f32[2,32], index: 0, kind: input, shape index: {}]
  %s1 = inlined_call_operand.vmem [shape: f32[2,128], index: 1, kind: input, shape index: {}]
  %s2 = inlined_call_operand.vmem [shape: f32[2,224], index: 2, kind: input, shape index: {}]
  %s3 = inlined_call_operand.vmem [shape: f32[2,32], index: 3, kind: input, shape index: {}]
  %s4 = inlined_call_operand.vmem [shape: f32[2,128], index: 4, kind: input, shape index: {}]
  %s5 = inlined_call_operand.vmem [shape: f32[2,224], index: 5, kind: input, shape index: {}]
  %s6 = inlined_call_operand.vmem [shape: f32[2], index: 6, kind: input, shape index: {}]
  %s7 = inlined_call_operand.hbm [shape: f32[2,2], index: 7, kind: output, shape index: {}]
  %s8 = sld [smem:[#allocation0]]
  $region42: #{flattened_output.1} parent=0
    _
  %s10 = ssub.s32 1, %s8
  %s11 = scalar_select 0, %s10, %s8
  $region1: #{flattened_output.1} parent=0
    #allocation2 [shape = 'u8[512]{0}', space=smem, size = 0x200, scoped, tag = 'input window, operand 6, single buffered']
    #allocation3 [shape = 's32[1]{0}', space=sflag, size = 0x4, scoped, tag = 'scoped memory for flattened_output.1']
    #allocation4 [shape = 's32[1]{0}', space=sflag, size = 0x4, scoped, tag = 'scoped memory for flattened_output.1']
    #allocation5 [shape = 'u8[1024]{0}', space=vmem, size = 0x400, scoped, tag = 'output window, operand 0, single buffered']
    %12 = vsyncpa [#allocation4], 0
    %13 = vsyncpa [#allocation3], 0
    // Predicated region
    $region2: #{flattened_output.1} parent=1 // pred_check
      _
    $region3: #{flattened_output.1} parent=1 // pred_check_branch
      %15 = sbr.rel (0) target = $region5
    $region4: #{flattened_output.1} parent=1 // pred_region
      _
    $region5: #{flattened_output.1} parent=1 // pred_fallthru
      _
    // Predicated region
    $region6: #{flattened_output.1} parent=1 // pred_check
      _
    $region7: #{flattened_output.1} parent=1 // pred_check_branch
      %17 = sbr.rel (0) target = $region9
    $region8: #{flattened_output.1} parent=1 // pred_region
      _
    $region9: #{flattened_output.1} parent=1 // pred_fallthru
      _
    // Predicated region
    $region10: #{flattened_output.1} parent=1 // pred_check
      _
    $region11: #{flattened_output.1} parent=1 // pred_check_branch
      %19 = sbr.rel (0) target = $region13
    $region12: #{flattened_output.1} parent=1 // pred_region
      _
    $region13: #{flattened_output.1} parent=1 // pred_fallthru
      _
    // Predicated region
    $region14: #{flattened_output.1} parent=1 // pred_check
      _
    $region15: #{flattened_output.1} parent=1 // pred_check_branch
      %21 = sbr.rel (0) target = $region17
    $region16: #{flattened_output.1} parent=1 // pred_region
      _
    $region17: #{flattened_output.1} parent=1 // pred_fallthru
      _
    // Predicated region
    $region18: #{flattened_output.1} parent=1 // pred_check
      _
    $region19: #{flattened_output.1} parent=1 // pred_check_branch
      %23 = sbr.rel (0) target = $region21
    $region20: #{flattened_output.1} parent=1 // pred_region
      _
    $region21: #{flattened_output.1} parent=1 // pred_fallthru
      _
    // Predicated region
    $region22: #{flattened_output.1} parent=1 // pred_check
      _
    $region23: #{flattened_output.1} parent=1 // pred_check_branch
      %25 = sbr.rel (0) target = $region25
    $region24: #{flattened_output.1} parent=1 // pred_region
      _
    $region25: #{flattened_output.1} parent=1 // pred_fallthru
      _
    // Predicated region
    $region26: #{flattened_output.1} parent=1 // pred_check
      _
    $region27: #{flattened_output.1} parent=1 // pred_check_branch
      %27 = sbr.rel (0) target = $region29
    $region28: #{flattened_output.1} parent=1 // pred_region
      %s29 = ssub.s32 16, 16
      %30 = vsyncadd [#allocation4], %s29
      %s32 = sshll.u32 %s6, 4
      %s33 = int_to_ptr.vmem [resolvable:$true] %s32
      %35 = dma.vmem_to_smem %s33, 16, [#allocation2], [#allocation4]
    $region29: #{flattened_output.1} parent=1 // pred_fallthru
      _
    // Predicated region
    $region30: #{flattened_output.1} parent=1 // pred_check
      _
    $region31: #{flattened_output.1} parent=1 // pred_check_branch
      %37 = sbr.rel (0) target = $region33
    $region32: #{flattened_output.1} parent=1 // pred_region
      %38 = dma.done [#allocation4], 16
    $region33: #{flattened_output.1} parent=1 // pred_fallthru
      _
    %39 = sfence
    %v40 = vld [vmem:[%s0] sm:$0x3]
    %v41 = vld [vmem:[%s3] sm:$0x3]
    %v42 = vlaneseq
    %v43 = vshrl.u32 %v42, 7
    %v44 = vsub.s32 0, %v43
    %v45 = vrot.slane %v41, %v44
    %v46 = vmul.f32 %v40, %v45
    %vm47 = vcmask 254976
    %v48 = vsel %vm47, %v46, 0.0
    %49 = vadd.xlane.f32.xlu0 %v48
    %v50 = vpop.xlane.xlu0 %49
    %v51 = vlaneseq
    %v52 = vshrl.u32 %v51, 7
    %v53 = vsub.s32 1, %v52
    %v54 = vrot.slane %v41, %v53
    %v55 = vmul.f32 %v40, %v54
    %v56 = vsel %vm47, %v55, 0.0
    %57 = vadd.xlane.f32.xlu0 %v56
    %v58 = vpop.xlane.xlu0 %57
    %v59 = vld [vmem:[%s1] sm:$0x3]
    %v60 = vld [vmem:[%s4] sm:$0x3]
    %v61 = vlaneseq
    %v62 = vshrl.u32 %v61, 7
    %v63 = vsub.s32 0, %v62
    %v64 = vrot.slane %v60, %v63
    %v65 = vmul.f32 %v59, %v64
    %vm66 = vcmask 1041408
    %v67 = vsel %vm66, %v65, 0.0
    %68 = vadd.xlane.f32.xlu0 %v67
    %v69 = vpop.xlane.xlu0 %68
    %v70 = vlaneseq
    %v71 = vshrl.u32 %v70, 7
    %v72 = vsub.s32 1, %v71
    %v73 = vrot.slane %v60, %v72
    %v74 = vmul.f32 %v59, %v73
    %v75 = vsel %vm66, %v74, 0.0
    %76 = vadd.xlane.f32.xlu0 %v75
    %v77 = vpop.xlane.xlu0 %76
    %v78 = vld [vmem:[%s2] sm:$0xf]
    %v79 = vld [vmem:[%s5] sm:$0xf]
    %v81 = vlaneseq
    %v82 = vshrl.u32 %v81, 7
    %v83 = vsub.s32 0, %v82
    %v84 = vrot.slane %v79, %v83
    %v85 = vlaneseq
    %v86 = vshrl.u32 %v85, 7
    %v87 = vsub.s32 2, %v86
    %v88 = vrot.slane %v79, %v87
    %v91 = vlaneseq
    %v92 = vshrl.u32 %v91, 7
    %v93 = vsub.s32 0, %v92
    %v94 = vrot.slane %v84, %v93
    %v95 = vlaneseq
    %v96 = vshrl.u32 %v95, 7
    %v97 = vsub.s32 0, %v96
    %v98 = vrot.slane %v88, %v97
    %v101 = vcombine.low %v94, %v98
    %v103 = vunpack.c.l.s4 1983009808
    %v104 = vunpack.c.0.s8 %v103
    %v105 = vlaneseq
    %v106 = vshrl.u32 %v105, 7
    %v107 = vsub.s32 %v104, %v106
    %v108 = vrot.slane %v101, %v107
    %v110 = vmul.f32 %v78, %v108
    %v113 = vunpack.c.l.s4 1983009808
    %v114 = vunpack.c.0.s8 %v113
    %v115 = vlaneseq
    %v116 = vshrl.u32 %v115, 7
    %v117 = vsub.s32 %v114, %v116
    %v118 = vrot.slane %v110, %v117
    %v119 = vcombine.high %v118, %v118
    %v122 = vsel %vm66, %v118, 0.0
    %vm123 = vcmask 779264
    %v124 = vsel %vm123, %v119, 0.0
    %v125 = vadd.f32 %v122, %v124
    %126 = vadd.xlane.f32.xlu0 %v125
    %v127 = vpop.xlane.xlu0 %126
    %v128 = vlaneseq
    %v129 = vshrl.u32 %v128, 7
    %v130 = vsub.s32 1, %v129
    %v131 = vrot.slane %v79, %v130
    %v132 = vlaneseq
    %v133 = vshrl.u32 %v132, 7
    %v134 = vsub.s32 3, %v133
    %v135 = vrot.slane %v79, %v134
    %v138 = vlaneseq
    %v139 = vshrl.u32 %v138, 7
    %v140 = vsub.s32 1, %v139
    %v141 = vrot.slane %v131, %v140
    %v142 = vlaneseq
    %v143 = vshrl.u32 %v142, 7
    %v144 = vsub.s32 1, %v143
    %v145 = vrot.slane %v135, %v144
    %v148 = vcombine.low %v141, %v145
    %v150 = vunpack.c.l.s4 1983009808
    %v151 = vunpack.c.0.s8 %v150
    %v152 = vlaneseq
    %v153 = vshrl.u32 %v152, 7
    %v154 = vsub.s32 %v151, %v153
    %v155 = vrot.slane %v148, %v154
    %v157 = vmul.f32 %v78, %v155
    %v160 = vunpack.c.l.s4 1983009808
    %v161 = vunpack.c.0.s8 %v160
    %v162 = vlaneseq
    %v163 = vshrl.u32 %v162, 7
    %v164 = vsub.s32 %v161, %v163
    %v165 = vrot.slane %v157, %v164
    %v166 = vcombine.high %v165, %v165
    %v169 = vsel %vm66, %v165, 0.0
    %v170 = vsel %vm123, %v166, 0.0
    %v171 = vadd.f32 %v169, %v170
    %172 = vadd.xlane.f32.xlu0 %v171
    %v173 = vpop.xlane.xlu0 %172
    %s174 = sld [smem:[#allocation2]]
    %s175 = sld [smem:[#allocation2 + $0x1]]
    %v176 = vadd.f32 %v50, %v69
    %v177 = vadd.f32 %v176, %v127
    %v178 = vadd.f32 %v58, %v77
    %v179 = vadd.f32 %v178, %v173
    %v180 = vsub.f32 %v177, %v179
    %s181 = ssub.f32 %s174, %s175
    %v182 = vstv %s181
    %v183 = vadd.f32 %v180, %v182
    %v184 = vsub.f32 0.0, %v183
    %v185 = vmul.f32 %v184, 1.442695
    %v186 = vpow.pop %v185
    %v187 = vadd.f32 %v186, 1.0
    %v188 = vrcp.pop %v187
    %v189 = vsub.f32 1.0, %v188
    %vm190 = vcmask 7168
    %v191 = vsel %vm190, %v188, %v189
    %vm192 = vcmask 9216
    %193 = vst.msk [vmem:[#allocation5] sm:$0x3] %vm192, %v191
    // Predicated region
    $region34: #{flattened_output.1} parent=1 // pred_check
      _
    $region35: #{flattened_output.1} parent=1 // pred_check_branch
      %195 = sbr.rel (0) target = $region37
    $region36: #{flattened_output.1} parent=1 // pred_region
      %s197 = ssub.s32 32, 32
      %198 = vsyncadd [#allocation3], %s197
      %s200 = sshll.u32 [#allocation5], 4
      %s201 = int_to_ptr.vmem [resolvable:$true] %s200
      %203 = dma.vmem_to_hbm [thread:$0]  %s201, 32, %s7, [#allocation3]
    $region37: #{flattened_output.1} parent=1 // pred_fallthru
      _
    // Predicated region
    $region38: #{flattened_output.1} parent=1 // pred_check
      _
    $region39: #{flattened_output.1} parent=1 // pred_check_branch
      %205 = sbr.rel (0) target = $region41
    $region40: #{flattened_output.1} parent=1 // pred_region
      %206 = dma.done [#allocation3], 32
    $region41: #{flattened_output.1} parent=1 // pred_fallthru
      _
    %207 = vsyncpa [#allocation3], 1
    %208 = vsyncpa [#allocation4], 1

</llo_original>
